<compile_context>
chip_gen: v5e
topology: v5e:2x2
jax: 0.10.0
libtpu: 0.0.40
codegen_flags: <defaults>
</compile_context>

<pallas_src>
import functools

import jax
import jax.numpy as jnp
from jax.experimental import pallas as pl
from jax.experimental.pallas import tpu as pltpu


def _chamfer_kernel(a1_ref, a2t_ref, d1_ref, d2_ref, rowmin_ref, colsum_ref,
                    *, inv_n1, inv_n2, bt):
    # a1_ref:    (BT, N1, F)  array1 batch tile (resident across column steps)
    # a2t_ref:   (BT, F, TN)  pre-transposed array2 column tile (lane-dense)
    # d1_ref/d2_ref: (BT, 1)  SMEM per-batch scalars (av_dist1 / av_dist2)
    # rowmin_ref: (BT, N1, 1) VMEM running min over array2 points
    # colsum_ref: (BT, 1, 1)  VMEM running sum of per-array2-point col mins
    j = pl.program_id(1)

    @pl.when(j == 0)
    def _init():
        rowmin_ref[...] = jnp.full_like(rowmin_ref, jnp.inf)
        colsum_ref[...] = jnp.zeros_like(colsum_ref)

    a1 = a1_ref[...].astype(jnp.float32)     # (BT, N1, F)
    a2t = a2t_ref[...].astype(jnp.float32)   # (BT, F, TN)

    sq1 = jnp.sum(a1 * a1, axis=-1, keepdims=True)    # (BT, N1, 1)
    sq2 = jnp.sum(a2t * a2t, axis=1, keepdims=True)   # (BT, 1, TN)
    cross = jnp.einsum("bnf,bfm->bnm", a1, a2t,
                       preferred_element_type=jnp.float32)  # (BT, N1, TN), MXU

    # m[b, p1, p2] = ||a1[b, p1] - a2[b, p2]||^2
    # (the clamp only guards tiny negatives from fp cancellation; torch's
    #  direct-difference formulation never goes negative)
    m = jnp.maximum(sq1 + sq2 - 2.0 * cross, 0.0)

    # Running min over array2 points: cross-tile combine is an elementwise VPU min.
    rowmin_ref[...] = jnp.minimum(rowmin_ref[...],
                                  jnp.min(m, axis=2, keepdims=True))
    # Col-mins (over array1 points) are complete per tile (rows are not tiled);
    # accumulate their running sum for the mean over array2 points.
    colsum_ref[...] = colsum_ref[...] + jnp.sum(
        jnp.min(m, axis=1, keepdims=True), axis=2, keepdims=True)

    @pl.when(j == pl.num_programs(1) - 1)
    def _finalize():
        for i in range(bt):  # static unroll over the (small) batch tile
            # av_dist1: mean over array2 points of min distance to array1
            d1_ref[i, 0] = jnp.sum(colsum_ref[i]) * inv_n2
            # av_dist2: mean over array1 points of min distance to array2
            d2_ref[i, 0] = jnp.sum(rowmin_ref[i]) * inv_n1


def _pick_col_tile(n2):
    """Column tile over array2's points; must divide n2 exactly."""
    if n2 <= 512:
        return n2
    for cand in (512, 256, 128):
        if n2 % cand == 0:
            return cand
    return n2  # awkward sizes: fall back to a single (untiled) column block


def _pick_batch_tile(batch, n1, tn, n2):
    """How many batch elements per grid step (amortize per-step overhead for tiny N)."""
    if tn != n2:
        return 1  # column-tiled (large-N) path: one batch element per step
    budget = 2 * 1024 * 1024  # f32 bytes allowed for the (BT, N1, TN) distance tile
    best = 1
    for cand in range(1, min(batch, 16) + 1):
        if batch % cand == 0 and cand * n1 * tn * 4 <= budget:
            best = cand
    return best


def chamfer_distance_pallas(array1, array2):
    """Returns (dist_all, dist1, dist2) exactly like chamfer_distance_numpy_test."""
    B, N1, F = array1.shape
    B2, N2, F2 = array2.shape
    assert B == B2 and F == F2

    # Cheap HBM-side transpose: kernel sees lane-dense (F, TN) tiles and needs
    # no in-kernel XLU transpose for either the matmul operand or sq2.
    a2t = jnp.swapaxes(array2, 1, 2)  # (B, F, N2)

    tn = _pick_col_tile(N2)
    bt = _pick_batch_tile(B, N1, tn, N2)
    n_col = N2 // tn
    n_bt = B // bt

    kernel = functools.partial(_chamfer_kernel,
                               inv_n1=1.0 / N1, inv_n2=1.0 / N2, bt=bt)

    d1_b, d2_b = pl.pallas_call(
        kernel,
        out_shape=(
            jax.ShapeDtypeStruct((B, 1), jnp.float32),
            jax.ShapeDtypeStruct((B, 1), jnp.float32),
        ),
        grid=(n_bt, n_col),
        in_specs=[
            pl.BlockSpec((bt, N1, F), lambda bi, j: (bi, 0, 0)),
            pl.BlockSpec((bt, F, tn), lambda bi, j: (bi, 0, j)),
        ],
        out_specs=(
            pl.BlockSpec((bt, 1), lambda bi, j: (bi, 0), memory_space=pltpu.SMEM),
            pl.BlockSpec((bt, 1), lambda bi, j: (bi, 0), memory_space=pltpu.SMEM),
        ),
        scratch_shapes=[
            pltpu.VMEM((bt, N1, 1), jnp.float32),  # running mins over array2 points
            pltpu.VMEM((bt, 1, 1), jnp.float32),   # running sum of col mins
        ],
        compiler_params=pltpu.CompilerParams(
            dimension_semantics=("parallel", "arbitrary"),
            vmem_limit_bytes=48 * 1024 * 1024,
        ),
    )(array1, a2t)

    dist1 = jnp.mean(d1_b)  # mean over batch of av_dist1
    dist2 = jnp.mean(d2_b)  # mean over batch of av_dist2
    return dist1 + dist2, dist1, dist2


def chamfer_distance_ref(array1, array2):
    """Pure-JAX reference mirroring the PyTorch code (for verification)."""
    diff = array1[:, :, None, :] - array2[:, None, :, :]   # (B, N1, N2, F)
    m = jnp.sum(diff * diff, axis=-1)                      # (B, N1, N2)
    av1 = jnp.mean(jnp.min(m, axis=1), axis=-1)            # av_dist1 per batch
    av2 = jnp.mean(jnp.min(m, axis=2), axis=-1)            # av_dist2 per batch
    dist1 = jnp.mean(av1)
    dist2 = jnp.mean(av2)
    return dist1 + dist2, dist1, dist2


if __name__ == "__main__":
    key = jax.random.PRNGKey(0)
    ok = True
    # The tiny module-style shape, plus a slightly larger one that exercises
    # the column-tiled accumulator path (N=1024 -> two column tiles of 512).
    for (B, N, F) in [(2, 16, 3), (2, 1024, 3)]:
        key, k1, k2 = jax.random.split(key, 3)
        array1 = jax.random.normal(k1, (B, N, F), dtype=jnp.float32)
        array2 = jax.random.normal(k2, (B, N, F), dtype=jnp.float32)

        out = jax.jit(chamfer_distance_pallas)(array1, array2)
        out = jax.block_until_ready(out)

        ref = chamfer_distance_ref(array1, array2)
        for got, want in zip(out, ref):
            if not jnp.allclose(got, want, rtol=2e-3, atol=1e-5):
                ok = False
                print("MISMATCH", (B, N, F), got, want)

    if ok:
        print("KERNEL_OK")
</pallas_src>

<mosaic_0001>
module attributes {stable_mosaic.version = 11 : i64} {
  func.func @_chamfer_kernel(%arg0: i32, %arg1: i32, %arg2: memref<2x16x3xf32, #tpu.memory_space<vmem>>, %arg3: memref<2x3x16xf32, #tpu.memory_space<vmem>>, %arg4: memref<2x1xf32, #tpu.memory_space<smem>>, %arg5: memref<2x1xf32, #tpu.memory_space<smem>>, %arg6: memref<2x16x1xf32, #tpu.memory_space<vmem>>, %arg7: memref<2x1x1xf32, #tpu.memory_space<vmem>>) attributes {dimension_semantics = [#tpu.dimension_semantics<parallel>, #tpu.dimension_semantics<arbitrary>], iteration_bounds = array<i64: 1, 1>, scalar_prefetch = 0 : i64, scratch_operands = 2 : i64, tpu.core_type = #tpu.core_type<tc>, window_params = [{transform_indices = @transform_0, window_bounds = array<i64: 2, 16, 3>}, {transform_indices = @transform_1, window_bounds = array<i64: 2, 3, 16>}, {transform_indices = @transform_2, window_bounds = array<i64: 2, 1>}, {transform_indices = @transform_3, window_bounds = array<i64: 2, 1>}]} {
    %c0_i32 = arith.constant 0 : i32
    %0 = arith.cmpi eq, %arg1, %c0_i32 : i32
    %1 = arith.extui %0 : i1 to i32
    %c0_i32_0 = arith.constant 0 : i32
    %2 = arith.cmpi ne, %1, %c0_i32_0 : i32
    scf.if %2 {
      %cst_27 = arith.constant 0x7F800000 : f32
      %35 = vector.broadcast %cst_27 : f32 to vector<2x16x1xf32>
      %c0_28 = arith.constant 0 : index
      %c0_29 = arith.constant 0 : index
      %c0_30 = arith.constant 0 : index
      %36 = vector.load %arg6[%c0_28, %c0_29, %c0_30] : memref<2x16x1xf32, #tpu.memory_space<vmem>>, vector<2x16x1xf32>
      tpu.vector_store %arg6[%c0_28, %c0_29, %c0_30], %35 {strides = array<i32>} : memref<2x16x1xf32, #tpu.memory_space<vmem>>, vector<2x16x1xf32>,
      %cst_31 = arith.constant 0.000000e+00 : f32
      %37 = vector.broadcast %cst_31 : f32 to vector<2x1x1xf32>
      %c0_32 = arith.constant 0 : index
      %c0_33 = arith.constant 0 : index
      %c0_34 = arith.constant 0 : index
      %38 = vector.load %arg7[%c0_32, %c0_33, %c0_34] : memref<2x1x1xf32, #tpu.memory_space<vmem>>, vector<2x1x1xf32>
      tpu.vector_store %arg7[%c0_32, %c0_33, %c0_34], %37 {strides = array<i32>} : memref<2x1x1xf32, #tpu.memory_space<vmem>>, vector<2x1x1xf32>,
    } else {
    }
    %c0 = arith.constant 0 : index
    %c0_1 = arith.constant 0 : index
    %c0_2 = arith.constant 0 : index
    %3 = vector.load %arg2[%c0, %c0_1, %c0_2] : memref<2x16x3xf32, #tpu.memory_space<vmem>>, vector<2x16x3xf32>
    %c0_3 = arith.constant 0 : index
    %c0_4 = arith.constant 0 : index
    %c0_5 = arith.constant 0 : index
    %4 = vector.load %arg3[%c0_3, %c0_4, %c0_5] : memref<2x3x16xf32, #tpu.memory_space<vmem>>, vector<2x3x16xf32>
    %5 = arith.mulf %3, %3 : vector<2x16x3xf32>
    %cst = arith.constant dense<0.000000e+00> : vector<2x16xf32>
    %6 = vector.multi_reduction <add>, %5, %cst [2] : vector<2x16x3xf32> to vector<2x16xf32>
    %7 = vector.shape_cast %6 : vector<2x16xf32> to vector<2x16x1xf32>
    %8 = arith.mulf %4, %4 : vector<2x3x16xf32>
    %cst_6 = arith.constant dense<0.000000e+00> : vector<2x16xf32>
    %9 = vector.multi_reduction <add>, %8, %cst_6 [1] : vector<2x3x16xf32> to vector<2x16xf32>
    %10 = vector.shape_cast %9 : vector<2x16xf32> to vector<2x1x16xf32>
    "tpu.trace_start"() <{level = 10 : i32, message = "bnf,bfm->bnm"}> : () -> ()
    %cst_7 = arith.constant dense<0.000000e+00> : vector<2x16x16xf32>
    %11 = tpu.matmul %3, %4, %cst_7 {dimension_numbers = #tpu.dot_dimension_numbers<[2], [1], [1], [2], [0, 0, 0, 1, 1, 2], [0], [0]>} : vector<2x16x3xf32>, vector<2x3x16xf32>, vector<2x16x16xf32> -> vector<2x16x16xf32>
    "tpu.trace_stop"() : () -> ()
    %12 = vector.broadcast %7 : vector<2x16x1xf32> to vector<2x16x16xf32>
    %13 = vector.broadcast %10 : vector<2x1x16xf32> to vector<2x16x16xf32>
    %14 = arith.addf %12, %13 : vector<2x16x16xf32>
    %cst_8 = arith.constant 2.000000e+00 : f32
    %15 = vector.broadcast %cst_8 : f32 to vector<2x16x16xf32>
    %16 = arith.mulf %15, %11 : vector<2x16x16xf32>
    %17 = arith.subf %14, %16 : vector<2x16x16xf32>
    %cst_9 = arith.constant 0.000000e+00 : f32
    %18 = vector.broadcast %cst_9 : f32 to vector<2x16x16xf32>
    %19 = arith.maximumf %17, %18 : vector<2x16x16xf32>
    %c0_10 = arith.constant 0 : index
    %c0_11 = arith.constant 0 : index
    %c0_12 = arith.constant 0 : index
    %20 = vector.load %arg6[%c0_10, %c0_11, %c0_12] : memref<2x16x1xf32, #tpu.memory_space<vmem>>, vector<2x16x1xf32>
    %cst_13 = arith.constant dense<0x7F800000> : vector<2x16xf32>
    %21 = vector.multi_reduction <minimumf>, %19, %cst_13 [2] : vector<2x16x16xf32> to vector<2x16xf32>
    %22 = vector.shape_cast %21 : vector<2x16xf32> to vector<2x16x1xf32>
    %23 = arith.minimumf %20, %22 : vector<2x16x1xf32>
    %c0_14 = arith.constant 0 : index
    %c0_15 = arith.constant 0 : index
    %c0_16 = arith.constant 0 : index
    %24 = vector.load %arg6[%c0_14, %c0_15, %c0_16] : memref<2x16x1xf32, #tpu.memory_space<vmem>>, vector<2x16x1xf32>
    tpu.vector_store %arg6[%c0_14, %c0_15, %c0_16], %23 {strides = array<i32>} : memref<2x16x1xf32, #tpu.memory_space<vmem>>, vector<2x16x1xf32>,
    %c0_17 = arith.constant 0 : index
    %c0_18 = arith.constant 0 : index
    %c0_19 = arith.constant 0 : index
    %25 = vector.load %arg7[%c0_17, %c0_18, %c0_19] : memref<2x1x1xf32, #tpu.memory_space<vmem>>, vector<2x1x1xf32>
    %cst_20 = arith.constant dense<0x7F800000> : vector<2x16xf32>
    %26 = vector.multi_reduction <minimumf>, %19, %cst_20 [1] : vector<2x16x16xf32> to vector<2x16xf32>
    %27 = vector.shape_cast %26 : vector<2x16xf32> to vector<2x1x16xf32>
    %cst_21 = arith.constant dense<0.000000e+00> : vector<2x1xf32>
    %28 = vector.multi_reduction <add>, %27, %cst_21 [2] : vector<2x1x16xf32> to vector<2x1xf32>
    %29 = vector.shape_cast %28 : vector<2x1xf32> to vector<2x1x1xf32>
    %30 = arith.addf %25, %29 : vector<2x1x1xf32>
    %c0_22 = arith.constant 0 : index
    %c0_23 = arith.constant 0 : index
    %c0_24 = arith.constant 0 : index
    %31 = vector.load %arg7[%c0_22, %c0_23, %c0_24] : memref<2x1x1xf32, #tpu.memory_space<vmem>>, vector<2x1x1xf32>
    tpu.vector_store %arg7[%c0_22, %c0_23, %c0_24], %30 {strides = array<i32>} : memref<2x1x1xf32, #tpu.memory_space<vmem>>, vector<2x1x1xf32>,
    %c0_i32_25 = arith.constant 0 : i32
    %32 = arith.cmpi eq, %arg1, %c0_i32_25 : i32
    %33 = arith.extui %32 : i1 to i32
    %c0_i32_26 = arith.constant 0 : i32
    %34 = arith.cmpi ne, %33, %c0_i32_26 : i32
    scf.if %34 {
      %c0_27 = arith.constant 0 : index
      %c0_28 = arith.constant 0 : index
      %c0_29 = arith.constant 0 : index
      %35 = vector.load %arg7[%c0_27, %c0_28, %c0_29] : memref<2x1x1xf32, #tpu.memory_space<vmem>>, vector<1x1x1xf32>
      %36 = vector.shape_cast %35 : vector<1x1x1xf32> to vector<1x1xf32>
      %37 = vector.shape_cast %36 : vector<1x1xf32> to vector<1x1x1xf32>
      %cst_30 = arith.constant dense<0.000000e+00> : vector<1xf32>
      %38 = vector.multi_reduction <add>, %37, %cst_30 [1, 2] : vector<1x1x1xf32> to vector<1xf32>
      %39 = vector.shape_cast %38 : vector<1xf32> to vector<1x1x1xf32>
      %40 = vector.extract %39[0, 0, 0] : f32 from vector<1x1x1xf32>
      %cst_31 = arith.constant 6.250000e-02 : f32
      %41 = arith.mulf %40, %cst_31 : f32
      %c0_32 = arith.constant 0 : index
      %c0_33 = arith.constant 0 : index
      %42 = memref.load %arg4[%c0_32, %c0_33] : memref<2x1xf32, #tpu.memory_space<smem>>
      memref.store %41, %arg4[%c0_32, %c0_33] : memref<2x1xf32, #tpu.memory_space<smem>>
      %c0_34 = arith.constant 0 : index
      %c0_35 = arith.constant 0 : index
      %c0_36 = arith.constant 0 : index
      %43 = vector.load %arg6[%c0_34, %c0_35, %c0_36] : memref<2x16x1xf32, #tpu.memory_space<vmem>>, vector<1x16x1xf32>
      %44 = vector.shape_cast %43 : vector<1x16x1xf32> to vector<16x1xf32>
      %45 = vector.shape_cast %44 : vector<16x1xf32> to vector<1x16x1xf32>
      %cst_37 = arith.constant dense<0.000000e+00> : vector<1xf32>
      %46 = vector.multi_reduction <add>, %45, %cst_37 [1, 2] : vector<1x16x1xf32> to vector<1xf32>
      %47 = vector.shape_cast %46 : vector<1xf32> to vector<1x1x1xf32>
      %48 = vector.extract %47[0, 0, 0] : f32 from vector<1x1x1xf32>
      %cst_38 = arith.constant 6.250000e-02 : f32
      %49 = arith.mulf %48, %cst_38 : f32
      %c0_39 = arith.constant 0 : index
      %c0_40 = arith.constant 0 : index
      %50 = memref.load %arg5[%c0_39, %c0_40] : memref<2x1xf32, #tpu.memory_space<smem>>
      memref.store %49, %arg5[%c0_39, %c0_40] : memref<2x1xf32, #tpu.memory_space<smem>>
      %c1 = arith.constant 1 : index
      %c0_41 = arith.constant 0 : index
      %c0_42 = arith.constant 0 : index
      %51 = vector.load %arg7[%c1, %c0_41, %c0_42] : memref<2x1x1xf32, #tpu.memory_space<vmem>>, vector<1x1x1xf32>
      %52 = vector.shape_cast %51 : vector<1x1x1xf32> to vector<1x1xf32>
      %53 = vector.shape_cast %52 : vector<1x1xf32> to vector<1x1x1xf32>
      %cst_43 = arith.constant dense<0.000000e+00> : vector<1xf32>
      %54 = vector.multi_reduction <add>, %53, %cst_43 [1, 2] : vector<1x1x1xf32> to vector<1xf32>
      %55 = vector.shape_cast %54 : vector<1xf32> to vector<1x1x1xf32>
      %56 = vector.extract %55[0, 0, 0] : f32 from vector<1x1x1xf32>
      %cst_44 = arith.constant 6.250000e-02 : f32
      %57 = arith.mulf %56, %cst_44 : f32
      %c1_45 = arith.constant 1 : index
      %c0_46 = arith.constant 0 : index
      %58 = memref.load %arg4[%c1_45, %c0_46] : memref<2x1xf32, #tpu.memory_space<smem>>
      memref.store %57, %arg4[%c1_45, %c0_46] : memref<2x1xf32, #tpu.memory_space<smem>>
      %c1_47 = arith.constant 1 : index
      %c0_48 = arith.constant 0 : index
      %c0_49 = arith.constant 0 : index
      %59 = vector.load %arg6[%c1_47, %c0_48, %c0_49] : memref<2x16x1xf32, #tpu.memory_space<vmem>>, vector<1x16x1xf32>
      %60 = vector.shape_cast %59 : vector<1x16x1xf32> to vector<16x1xf32>
      %61 = vector.shape_cast %60 : vector<16x1xf32> to vector<1x16x1xf32>
      %cst_50 = arith.constant dense<0.000000e+00> : vector<1xf32>
      %62 = vector.multi_reduction <add>, %61, %cst_50 [1, 2] : vector<1x16x1xf32> to vector<1xf32>
      %63 = vector.shape_cast %62 : vector<1xf32> to vector<1x1x1xf32>
      %64 = vector.extract %63[0, 0, 0] : f32 from vector<1x1x1xf32>
      %cst_51 = arith.constant 6.250000e-02 : f32
      %65 = arith.mulf %64, %cst_51 : f32
      %c1_52 = arith.constant 1 : index
      %c0_53 = arith.constant 0 : index
      %66 = memref.load %arg5[%c1_52, %c0_53] : memref<2x1xf32, #tpu.memory_space<smem>>
      memref.store %65, %arg5[%c1_52, %c0_53] : memref<2x1xf32, #tpu.memory_space<smem>>
    } else {
    }
    return
  }
  func.func @transform_0(%arg0: i32, %arg1: i32) -> (i32, i32, i32) {
    %c0_i32 = arith.constant 0 : i32
    %c0_i32_0 = arith.constant 0 : i32
    %c0_i32_1 = arith.constant 0 : i32
    return %arg0, %c0_i32, %c0_i32_0 : i32, i32, i32
  }
  func.func @transform_1(%arg0: i32, %arg1: i32) -> (i32, i32, i32) {
    %c0_i32 = arith.constant 0 : i32
    %c0_i32_0 = arith.constant 0 : i32
    return %arg0, %c0_i32, %arg1 : i32, i32, i32
  }
  func.func @transform_2(%arg0: i32, %arg1: i32) -> (i32, i32) {
    %c0_i32 = arith.constant 0 : i32
    %c0_i32_0 = arith.constant 0 : i32
    return %arg0, %c0_i32 : i32, i32
  }
  func.func @transform_3(%arg0: i32, %arg1: i32) -> (i32, i32) {
    %c0_i32 = arith.constant 0 : i32
    %c0_i32_0 = arith.constant 0 : i32
    return %arg0, %c0_i32 : i32, i32
  }
}

</mosaic_0001>

<llo_original>
// kernel: chamfer_distance_pallas.1
$region0: #{chamfer_distance_pallas.1}
  #allocation0 [shape = 'u32[]', space=smem, size = 0x4, offset = 0x4, fixed_abs, tag = 'smem constant byte address 0x4 - core index']
  #allocation1 [shape = 'u32[72,128]{1,0:T(1,128)}', space=vmem, size = 0x9000, scoped, tag = 'internal scratch']
  #allocation2 [shape = 'f32[2,16,1]{2,1,0:T(8,128)}', space=vmem, size = 0x4000, scoped, tag = 'scratch operand']
  #allocation3 [shape = 'f32[2,1,1]{2,1,0:T(1,128)}', space=vmem, size = 0x400, scoped, tag = 'scratch operand']
  %s0 = inlined_call_operand.vmem [shape: f32[2,16,3], index: 0, kind: input, shape index: {}]
  %s1 = inlined_call_operand.vmem [shape: f32[2,3,16], index: 1, kind: input, shape index: {}]
  %s2 = inlined_call_operand.vmem [shape: f32[2,1], index: 2, kind: output, shape index: {0}]
  %s3 = inlined_call_operand.vmem [shape: f32[2,1], index: 3, kind: output, shape index: {1}]
  %4 = xla_tuple %s2, %s3
  %s5 = sld [smem:[#allocation0]]
  $region34: #{chamfer_distance_pallas.1} parent=0
    _
  %s7 = ssub.s32 1, %s5
  %s8 = scalar_select 0, %s7, %s5
  $region1: #{chamfer_distance_pallas.1} parent=0
    #allocation4 [shape = 'u8[1024]{0}', space=smem, size = 0x400, scoped, tag = 'output window, operand 0, single buffered']
    #allocation5 [shape = 's32[1]{0}', space=sflag, size = 0x4, scoped, tag = 'scoped memory for chamfer_distance_pallas.1']
    #allocation6 [shape = 'u8[1024]{0}', space=smem, size = 0x400, scoped, tag = 'output window, operand 1, single buffered']
    #allocation7 [shape = 's32[1]{0}', space=sflag, size = 0x4, scoped, tag = 'scoped memory for chamfer_distance_pallas.1']
    %9 = vsyncpa [#allocation5], 0
    %10 = vsyncpa [#allocation7], 0
    // Predicated region
    $region2: #{chamfer_distance_pallas.1} parent=1 // pred_check
      _
    $region3: #{chamfer_distance_pallas.1} parent=1 // pred_check_branch
      %12 = sbr.rel (0) target = $region5
    $region4: #{chamfer_distance_pallas.1} parent=1 // pred_region
      _
    $region5: #{chamfer_distance_pallas.1} parent=1 // pred_fallthru
      _
    // Predicated region
    $region6: #{chamfer_distance_pallas.1} parent=1 // pred_check
      _
    $region7: #{chamfer_distance_pallas.1} parent=1 // pred_check_branch
      %14 = sbr.rel (0) target = $region9
    $region8: #{chamfer_distance_pallas.1} parent=1 // pred_region
      _
    $region9: #{chamfer_distance_pallas.1} parent=1 // pred_fallthru
      _
    %p15 = scmp.eq.s32.totalorder 0, 0
    // Predicated region
    $region10: #{chamfer_distance_pallas.1} parent=1 // pred_check
      %p16 = pneg %p15
    $region11: #{chamfer_distance_pallas.1} parent=1 // pred_check_branch
      %18 = sbr.rel (%p16) target = $region13
    $region12: #{chamfer_distance_pallas.1} parent=1 // pred_region
      %vm19 = vcmask 7168
      %20 = vst.msk [vmem:[#allocation2] sm:$0xff] %vm19, inf
      %21 = vst.msk [vmem:[#allocation2 + $0x8] sm:$0xff] %vm19, inf
      %22 = vst.msk [vmem:[#allocation2 + $0x10] sm:$0xff] %vm19, inf
      %23 = vst.msk [vmem:[#allocation2 + $0x18] sm:$0xff] %vm19, inf
      %vm24 = vcmask 0
      %25 = vst.msk [vmem:[#allocation3] sm:$0x1] %vm24, 0.0
      %26 = vst.msk [vmem:[#allocation3 + $0x1] sm:$0x1] %vm24, 0.0
    $region13: #{chamfer_distance_pallas.1} parent=1 // pred_fallthru
      _
    %v27 = vld [vmem:[%s0] sm:$0xff]
    %v28 = vld [vmem:[%s0 + $0x8] sm:$0xff]
    %v29 = vld [vmem:[%s0 + $0x10] sm:$0xff]
    %v30 = vld [vmem:[%s0 + $0x18] sm:$0xff]
    %v31 = vld [vmem:[%s1] sm:$0x7]
    %v32 = vld [vmem:[%s1 + $0x4] sm:$0x7]
    %v33 = vmul.f32 %v27, %v27
    %v34 = vmul.f32 %v28, %v28
    %v35 = vmul.f32 %v29, %v29
    %v36 = vmul.f32 %v30, %v30
    %vm37 = vcmask 23552
    %v38 = vsel %vm37, %v33, 0.0
    %39 = vadd.xlane.f32.xlu0 %v38
    %v40 = vpop.xlane.xlu0 %39
    %v41 = vsel %vm37, %v34, 0.0
    %42 = vadd.xlane.f32.xlu0 %v41
    %v43 = vpop.xlane.xlu0 %42
    %v44 = vsel %vm37, %v35, 0.0
    %45 = vadd.xlane.f32.xlu0 %v44
    %v46 = vpop.xlane.xlu0 %45
    %v47 = vsel %vm37, %v36, 0.0
    %48 = vadd.xlane.f32.xlu0 %v47
    %v49 = vpop.xlane.xlu0 %48
    %v50 = vmul.f32 %v31, %v31
    %v51 = vmul.f32 %v32, %v32
    %vm52 = vcmask 124928
    %v53 = vsel %vm52, %v50, 0.0
    %v54 = vrot.slane %v53, 4
    %v55 = vadd.f32 %v53, %v54
    %v56 = vrot.slane %v55, 2
    %v57 = vadd.f32 %v55, %v56
    %v58 = vrot.slane %v57, 1
    %v59 = vadd.f32 %v57, %v58
    %v60 = vsel %vm52, %v51, 0.0
    %v61 = vrot.slane %v60, 4
    %v62 = vadd.f32 %v60, %v61
    %v63 = vrot.slane %v62, 2
    %v64 = vadd.f32 %v62, %v63
    %v65 = vrot.slane %v64, 1
    %v66 = vadd.f32 %v64, %v65
    %v68 = vsel %vm37, %v27, 0
    %v71 = vsel %vm37, %v28, 0
    %vm73 = vcmask 1042432
    %v75 = vsel %vm73, %v31, 0
    %77 = vmatpush.msra.mxu0 0.0
    %78 = vmatpush.msra.mxu0 0.0
    %79 = vmatpush.msra.mxu0 0.0
    %80 = vmatpush.msra.mxu0 0.0
    %81 = vmatpush.msra.mxu0 0.0
    %82 = vmatpush.msra.mxu0 0.0
    %83 = vmatpush.msra.mxu0 0.0
    %84 = vmatpush.msra.mxu0 0.0
    %85 = vmatpush.msra.mxu0 0.0
    %86 = vmatpush.msra.mxu0 0.0
    %87 = vmatpush.msra.mxu0 0.0
    %88 = vmatpush.msra.mxu0 0.0
    %89 = vmatpush.msra.mxu0 0.0
    %90 = vmatpush.msra.mxu0 0.0
    %91 = vmatpush.msra.mxu0 0.0
    %92 = vmatpush.msra.mxu0 %v75
    %93 = vmatmul.f32.gmra.mxu0 %v68
    %v94 = vpop.f32.mrf.mxu0
    %v95 = vadd.f32 0.0, %v94
    %96 = vmatmul.f32.gmra.mxu0 %v71
    %v97 = vpop.f32.mrf.mxu0
    %v98 = vadd.f32 0.0, %v97
    %99 = vdwg.mxu0
    %v101 = vsel %vm37, %v29, 0
    %v104 = vsel %vm37, %v30, 0
    %v107 = vsel %vm73, %v32, 0
    %109 = vmatpush.msra.mxu0 0.0
    %110 = vmatpush.msra.mxu0 0.0
    %111 = vmatpush.msra.mxu0 0.0
    %112 = vmatpush.msra.mxu0 0.0
    %113 = vmatpush.msra.mxu0 0.0
    %114 = vmatpush.msra.mxu0 0.0
    %115 = vmatpush.msra.mxu0 0.0
    %116 = vmatpush.msra.mxu0 0.0
    %117 = vmatpush.msra.mxu0 0.0
    %118 = vmatpush.msra.mxu0 0.0
    %119 = vmatpush.msra.mxu0 0.0
    %120 = vmatpush.msra.mxu0 0.0
    %121 = vmatpush.msra.mxu0 0.0
    %122 = vmatpush.msra.mxu0 0.0
    %123 = vmatpush.msra.mxu0 0.0
    %124 = vmatpush.msra.mxu0 %v107
    %125 = vmatmul.f32.gmra.mxu0 %v101
    %v126 = vpop.f32.mrf.mxu0
    %v127 = vadd.f32 0.0, %v126
    %128 = vmatmul.f32.gmra.mxu0 %v104
    %v129 = vpop.f32.mrf.mxu0
    %v130 = vadd.f32 0.0, %v129
    %131 = vdwg.mxu0
    %v132 = vadd.f32 %v40, %v59
    %v133 = vadd.f32 %v43, %v59
    %v134 = vadd.f32 %v46, %v66
    %v135 = vadd.f32 %v49, %v66
    %v136 = vmul.f32 %v95, 2.0
    %v137 = vmul.f32 %v98, 2.0
    %v138 = vmul.f32 %v127, 2.0
    %v139 = vmul.f32 %v130, 2.0
    %v140 = vsub.f32 %v132, %v136
    %v141 = vsub.f32 %v133, %v137
    %v142 = vsub.f32 %v134, %v138
    %v143 = vsub.f32 %v135, %v139
    %v144 = vmax.f32 %v140, 0.0
    %v145 = vmax.f32 %v141, 0.0
    %v146 = vmax.f32 %v142, 0.0
    %v147 = vmax.f32 %v143, 0.0
    %v148 = vld [vmem:[#allocation2] sm:$0xff]
    %v149 = vld [vmem:[#allocation2 + $0x8] sm:$0xff]
    %v150 = vld [vmem:[#allocation2 + $0x10] sm:$0xff]
    %v151 = vld [vmem:[#allocation2 + $0x18] sm:$0xff]
    %vm152 = vcmask 130048
    %v153 = vsel %vm152, %v144, inf
    %154 = vmin.xlane.f32.xlu0 %v153
    %v155 = vpop.xlane.xlu0 %154
    %v156 = vsel %vm152, %v145, inf
    %157 = vmin.xlane.f32.xlu0 %v156
    %v158 = vpop.xlane.xlu0 %157
    %v159 = vsel %vm152, %v146, inf
    %160 = vmin.xlane.f32.xlu0 %v159
    %v161 = vpop.xlane.xlu0 %160
    %v162 = vsel %vm152, %v147, inf
    %163 = vmin.xlane.f32.xlu0 %v162
    %v164 = vpop.xlane.xlu0 %163
    %v165 = vmin.f32 %v148, %v155
    %v166 = vmin.f32 %v149, %v158
    %v167 = vmin.f32 %v150, %v161
    %v168 = vmin.f32 %v151, %v164
    %vm169 = vcmask 7168
    %170 = vst.msk [vmem:[#allocation2] sm:$0xff] %vm169, %v165
    %171 = vst.msk [vmem:[#allocation2 + $0x8] sm:$0xff] %vm169, %v166
    %172 = vst.msk [vmem:[#allocation2 + $0x10] sm:$0xff] %vm169, %v167
    %173 = vst.msk [vmem:[#allocation2 + $0x18] sm:$0xff] %vm169, %v168
    %v174 = vld [vmem:[#allocation3] sm:$0x1]
    %v175 = vld [vmem:[#allocation3 + $0x1] sm:$0x1]
    %v176 = vmin.f32 %v153, %v156
    %v177 = vrot.slane %v176, 4
    %v178 = vmin.f32 %v176, %v177
    %v179 = vrot.slane %v178, 2
    %v180 = vmin.f32 %v178, %v179
    %v181 = vrot.slane %v180, 1
    %v182 = vmin.f32 %v180, %v181
    %v183 = vmin.f32 %v159, %v162
    %v184 = vrot.slane %v183, 4
    %v185 = vmin.f32 %v183, %v184
    %v186 = vrot.slane %v185, 2
    %v187 = vmin.f32 %v185, %v186
    %v188 = vrot.slane %v187, 1
    %v189 = vmin.f32 %v187, %v188
    %v190 = vsel %vm152, %v182, 0.0
    %191 = vadd.xlane.f32.xlu0 %v190
    %v192 = vpop.xlane.xlu0 %191
    %v193 = vsel %vm152, %v189, 0.0
    %194 = vadd.xlane.f32.xlu0 %v193
    %v195 = vpop.xlane.xlu0 %194
    %v196 = vadd.f32 %v174, %v192
    %v197 = vadd.f32 %v175, %v195
    %vm198 = vcmask 0
    %199 = vst.msk [vmem:[#allocation3] sm:$0x1] %vm198, %v196
    %200 = vst.msk [vmem:[#allocation3 + $0x1] sm:$0x1] %vm198, %v197
    // Predicated region
    $region14: #{chamfer_distance_pallas.1} parent=1 // pred_check
      %p201 = pneg %p15
    $region15: #{chamfer_distance_pallas.1} parent=1 // pred_check_branch
      %203 = sbr.rel (%p201) target = $region17
    $region16: #{chamfer_distance_pallas.1} parent=1 // pred_region
      %v204 = vld [vmem:[#allocation3] sm:$0x1]
      %v205 = vadd.f32 %v204, 0.0
      %s206 = vtos %v205
      %s207 = smul.f32 %s206, 0.0625
      %s208 = scalar_lea.smem [#allocation4], 0
      %209 = sst [smem:[%s208]] %s207
      %v210 = vld [vmem:[#allocation2] sm:$0xff]
      %v211 = vld [vmem:[#allocation2 + $0x8] sm:$0xff]
      %v212 = vsel %vm169, %v210, 0.0
      %v213 = vsel %vm169, %v211, 0.0
      %v214 = vadd.f32 %v212, %v213
      %215 = vadd.xlane.f32.xlu0 %v214
      %v216 = vpop.xlane.xlu0 %215
      %v217 = vrot.slane %v216, 4
      %v218 = vadd.f32 %v216, %v217
      %v219 = vrot.slane %v218, 2
      %v220 = vadd.f32 %v218, %v219
      %v221 = vrot.slane %v220, 1
      %v222 = vadd.f32 %v220, %v221
      %s223 = vtos %v222
      %s224 = smul.f32 %s223, 0.0625
      %s225 = scalar_lea.smem [#allocation6], 0
      %226 = sst [smem:[%s225]] %s224
      %s227 = scalar_lea.vmem [#allocation3], 1
      %v228 = vld [vmem:[%s227] sm:$0x1]
      %v229 = vadd.f32 %v228, 0.0
      %s230 = vtos %v229
      %s231 = smul.f32 %s230, 0.0625
      %s232 = scalar_lea.smem [#allocation4], 128
      %233 = sst [smem:[%s232]] %s231
      %s234 = scalar_lea.vmem [#allocation2], 16
      %v235 = vld [vmem:[%s234] sm:$0xff]
      %v236 = vld [vmem:[%s234 + $0x8] sm:$0xff]
      %v237 = vsel %vm169, %v235, 0.0
      %v238 = vsel %vm169, %v236, 0.0
      %v239 = vadd.f32 %v237, %v238
      %240 = vadd.xlane.f32.xlu0 %v239
      %v241 = vpop.xlane.xlu0 %240
      %v242 = vrot.slane %v241, 4
      %v243 = vadd.f32 %v241, %v242
      %v244 = vrot.slane %v243, 2
      %v245 = vadd.f32 %v243, %v244
      %v246 = vrot.slane %v245, 1
      %v247 = vadd.f32 %v245, %v246
      %s248 = vtos %v247
      %s249 = smul.f32 %s248, 0.0625
      %s250 = scalar_lea.smem [#allocation6], 128
      %251 = sst [smem:[%s250]] %s249
    $region17: #{chamfer_distance_pallas.1} parent=1 // pred_fallthru
      _
    // Predicated region
    $region18: #{chamfer_distance_pallas.1} parent=1 // pred_check
      _
    $region19: #{chamfer_distance_pallas.1} parent=1 // pred_check_branch
      %253 = sbr.rel (0) target = $region21
    $region20: #{chamfer_distance_pallas.1} parent=1 // pred_region
      %255 = vsyncadd [#allocation5], 0
      %s257 = sshll.u32 %s2, 4
      %s258 = int_to_ptr.vmem [resolvable:$true] %s257
      %260 = dma.smem_to_vmem [#allocation4], 32, %s258, [#allocation5]
    $region21: #{chamfer_distance_pallas.1} parent=1 // pred_fallthru
      _
    // Predicated region
    $region22: #{chamfer_distance_pallas.1} parent=1 // pred_check
      _
    $region23: #{chamfer_distance_pallas.1} parent=1 // pred_check_branch
      %262 = sbr.rel (0) target = $region25
    $region24: #{chamfer_distance_pallas.1} parent=1 // pred_region
      %264 = vsyncadd [#allocation7], 0
      %s266 = sshll.u32 %s3, 4
      %s267 = int_to_ptr.vmem [resolvable:$true] %s266
      %269 = dma.smem_to_vmem [#allocation6], 32, %s267, [#allocation7]
    $region25: #{chamfer_distance_pallas.1} parent=1 // pred_fallthru
      _
    // Predicated region
    $region26: #{chamfer_distance_pallas.1} parent=1 // pred_check
      _
    $region27: #{chamfer_distance_pallas.1} parent=1 // pred_check_branch
      %271 = sbr.rel (0) target = $region29
    $region28: #{chamfer_distance_pallas.1} parent=1 // pred_region
      %273 = dma.done [#allocation5], 32
    $region29: #{chamfer_distance_pallas.1} parent=1 // pred_fallthru
      _
    // Predicated region
    $region30: #{chamfer_distance_pallas.1} parent=1 // pred_check
      _
    $region31: #{chamfer_distance_pallas.1} parent=1 // pred_check_branch
      %275 = sbr.rel (0) target = $region33
    $region32: #{chamfer_distance_pallas.1} parent=1 // pred_region
      %277 = dma.done [#allocation7], 32
    $region33: #{chamfer_distance_pallas.1} parent=1 // pred_fallthru
      _
    %278 = sfence
    %279 = vsyncpa [#allocation5], 1
    %280 = vsyncpa [#allocation7], 1

</llo_original>
